<compile_context>
chip_gen: v7x
topology: tpu7x:2x2x1
jax: 0.10.0
libtpu: 0.0.40
codegen_flags: <defaults>
</compile_context>

<pallas_src>
import jax
import jax.numpy as jnp
from jax.experimental import pallas as pl
from jax.experimental.pallas import tpu as pltpu


# ---------------------------------------------------------------------------
# Kernels
# ---------------------------------------------------------------------------
def _linear_pool_kernel_single_k(x_ref, w_ref, b_ref, o_ref):
    """Fast path: the whole K dimension is one block (no accumulator).

    x_ref: (tm, K) input dtype; w_ref: (K, tn) compute dtype;
    b_ref: (1, tn) f32; o_ref: (tm, tn) output dtype.
    """
    acc = jnp.dot(x_ref[...].astype(w_ref.dtype), w_ref[...],
                  preferred_element_type=jnp.float32)
    o_ref[...] = (acc + b_ref[...]).astype(o_ref.dtype)


def _linear_pool_kernel_multi_k(x_ref, w_ref, b_ref, o_ref, acc_ref):
    """K split over the last grid axis; accumulate in f32 VMEM scratch."""
    k_idx = pl.program_id(2)
    part = jnp.dot(x_ref[...].astype(w_ref.dtype), w_ref[...],
                   preferred_element_type=jnp.float32)

    @pl.when(k_idx == 0)
    def _():
        acc_ref[...] = part          # no zero-fill + read-modify-write on step 0

    @pl.when(k_idx > 0)
    def _():
        acc_ref[...] += part

    @pl.when(k_idx == pl.num_programs(2) - 1)
    def _():
        o_ref[...] = (acc_ref[...] + b_ref[...]).astype(o_ref.dtype)


# ---------------------------------------------------------------------------
# Tiling / VMEM heuristics
# ---------------------------------------------------------------------------
def _round_up(x, m):
    return ((x + m - 1) // m) * m


def _vmem_budget_bytes():
    """~80% of this generation's physical VMEM (64 MiB fallback: v7x-safe)."""
    try:
        cap = int(pltpu.get_tpu_info().vmem_capacity_bytes)
    except Exception:
        cap = 64 * 1024 * 1024
    return max(24 * 1024 * 1024, int(0.80 * cap))


def _est_vmem_bytes(tm, tk, tn, K, Np, ex, ew, eo):
    k_split = tk < K
    n_split = tn < Np
    w_bufs = 1 if (not k_split and not n_split) else 2   # resident -> 1 buffer
    b_bufs = 1 if not n_split else 2
    u = 2 * tm * tk * ex            # X blocks (double-buffered stream)
    u += w_bufs * tk * tn * ew      # weight block(s)
    u += 2 * tm * tn * eo           # output blocks
    u += b_bufs * max(128, Np) * 4  # bias (tiny)
    if k_split:
        u += tm * tn * 4            # f32 accumulator scratch
    return u


def _choose_tiles(M, K, Np, ex, ew, eo, budget, max_tm=None):
    """Pick (tm, tk, tn): prefer K and N unsplit (weight DMA'd exactly once,
    constant block index), minimize estimated HBM traffic, then grid steps."""
    cap_m = M if max_tm is None else min(M, max_tm)
    tm_cands = [t for t in (2048, 1024, 512, 256, 128, 64, 32, 16, 8) if t <= cap_m]
    if M <= 2048 and (max_tm is None or M <= max_tm):
        tm_cands.append(M)          # full-M block is always layout-legal
    if not tm_cands:
        tm_cands.append(M)          # M < 8: full-dim block
    tm_cands = sorted(set(tm_cands), reverse=True)

    tn_cands = [Np] + [t for t in (2048, 1024, 512, 256, 128)
                       if t < Np and Np % t == 0]
    tk_cands = [K] + [t for t in (4096, 2048, 1024, 512, 256, 128)
                      if t < K and K % t == 0]

    best = None
    for tk in tk_cands:
        for tn in tn_cands:
            for tm in tm_cands:
                if _est_vmem_bytes(tm, tk, tn, K, Np, ex, ew, eo) > budget:
                    continue
                n_i = (M + tm - 1) // tm
                n_j = Np // tn
                n_k = K // tk
                w_resident = (n_j == 1 and n_k == 1)
                x_reads = n_j if n_k > 1 else 1   # X block idx constant over j if K unsplit
                w_reads = 1 if w_resident else n_i
                hbm = (x_reads * M * K * ex + w_reads * K * Np * ew
                       + M * Np * eo)
                score = (hbm, n_i * n_j * n_k)
                if best is None or score < best[0]:
                    best = (score, (tm, tk, tn))
    if best is not None:
        return best[1]
    # Nothing fits the budget: smallest config, let the compiler do its best.
    return tm_cands[-1], tk_cands[-1], tn_cands[-1]


# ---------------------------------------------------------------------------
# Wrapper
# ---------------------------------------------------------------------------
def linear_pool(x, weight, bias, downsampling_factor, *,
                compute_dtype=jnp.bfloat16, max_tile_m=None):
    """LinearPool forward.

    x: (B, S, D); weight: (D, k*D) [PyTorch nn.Linear layout]; bias: (D,).
    compute_dtype: MXU input dtype (default bf16; accumulation is always f32).
                   Pass jnp.float32 / None for bit-faithful f32 compute.
    """
    B, S, D = x.shape
    k = int(downsampling_factor)
    assert S % k == 0, "seq_len must be divisible by downsampling_factor"
    new_S = S // k
    M, K, N = B * new_S, k * D, D
    assert weight.shape == (N, K) and bias.shape == (N,)

    cdt = jnp.dtype(compute_dtype) if compute_dtype is not None else x.dtype
    Np = _round_up(N, 128)          # lane-dense output stores

    # One-time HBM-side prep: transpose W to (K, N) (canonical MXU feed),
    # cast W to the compute dtype, pad N if needed. X keeps its input dtype
    # (single HBM pass); it is cast to the compute dtype inside the kernel.
    x2d = x.reshape(M, K)
    w_t = weight.T.astype(cdt)                       # (K, N)
    b2d = bias.astype(jnp.float32).reshape(1, N)
    if Np != N:
        w_t = jnp.pad(w_t, ((0, 0), (0, Np - N)))
        b2d = jnp.pad(b2d, ((0, 0), (0, Np - N)))

    ex, ew, eo = x2d.dtype.itemsize, w_t.dtype.itemsize, x.dtype.itemsize
    budget = _vmem_budget_bytes()
    tm, tk, tn = _choose_tiles(M, K, Np, ex, ew, eo, budget, max_tm=max_tile_m)

    n_i, n_j, n_k = pl.cdiv(M, tm), Np // tn, K // tk
    grid = (n_i, n_j, n_k)
    k_split = n_k > 1
    w_resident = (n_j == 1 and n_k == 1)

    need = _est_vmem_bytes(tm, tk, tn, K, Np, ex, ew, eo)
    vmem_limit = int(min(budget, max(32 * 1024 * 1024, int(1.5 * need))))

    # HBM traffic estimate, accounting for re-streams when K or N is split.
    x_reads = n_j if k_split else 1
    w_reads = 1 if w_resident else n_i
    cost = pl.CostEstimate(
        flops=2 * M * K * Np,
        transcendentals=0,
        bytes_accessed=(x_reads * M * K * ex + w_reads * K * Np * ew
                        + Np * 4 + M * Np * eo),
    )

    kernel = _linear_pool_kernel_multi_k if k_split else _linear_pool_kernel_single_k
    scratch = [pltpu.VMEM((tm, tn), jnp.float32)] if k_split else []

    def build(use_single_buffer):
        def spec(shape, index_map, resident):
            if resident and use_single_buffer:
                return pl.BlockSpec(shape, index_map, pipeline_mode=pl.Buffered(1))
            return pl.BlockSpec(shape, index_map)

        return pl.pallas_call(
            kernel,
            out_shape=jax.ShapeDtypeStruct((M, Np), x.dtype),
            grid_spec=pltpu.PrefetchScalarGridSpec(
                num_scalar_prefetch=0,
                grid=grid,
                in_specs=[
                    pl.BlockSpec((tm, tk), lambda i, j, kk: (i, kk)),      # X streamed
                    spec((tk, tn), lambda i, j, kk: (kk, j), w_resident),  # W
                    spec((1, tn), lambda i, j, kk: (0, j), n_j == 1),      # bias
                ],
                out_specs=pl.BlockSpec((tm, tn), lambda i, j, kk: (i, j)),
                scratch_shapes=scratch,
            ),
            compiler_params=pltpu.CompilerParams(
                dimension_semantics=("parallel", "parallel", "arbitrary"),
                vmem_limit_bytes=vmem_limit,
            ),
            cost_estimate=cost,
        )

    try:
        out2d = build(True)(x2d, w_t, b2d)
    except Exception:
        # If this JAX build rejects pl.Buffered(1), fall back to default
        # double buffering for the resident blocks (correctness unaffected).
        out2d = build(False)(x2d, w_t, b2d)

    if Np != N:
        out2d = out2d[:, :N]
    return out2d.reshape(B, new_S, N)


def init_linear_pool_params(key, d_model, downsampling_factor):
    """Parameter init matching the PyTorch module's shapes.

    weight: (d_model, k*d_model) xavier_uniform; bias: (d_model,) uniform in
    +/- 1/sqrt(fan_in) (PyTorch nn.Linear default for bias).
    """
    k = downsampling_factor
    fan_in = k * d_model
    fan_out = d_model
    kw, kb = jax.random.split(key)
    limit_w = (6.0 / (fan_in + fan_out)) ** 0.5
    weight = jax.random.uniform(
        kw, (fan_out, fan_in), dtype=jnp.float32, minval=-limit_w, maxval=limit_w)
    limit_b = 1.0 / (fan_in ** 0.5)
    bias = jax.random.uniform(
        kb, (fan_out,), dtype=jnp.float32, minval=-limit_b, maxval=limit_b)
    return weight, bias


if __name__ == "__main__":
    key = jax.random.PRNGKey(0)
    k1, k2, k3, k4, k5, k6 = jax.random.split(key, 6)

    # 1) Small shapes consistent with the module, exact f32 compute path.
    B, S, D, F = 2, 8, 32, 2
    x = jax.random.normal(k1, (B, S, D), dtype=jnp.float32)
    w, b = init_linear_pool_params(k2, D, F)
    out = jax.block_until_ready(linear_pool(x, w, b, F, compute_dtype=jnp.float32))
    ref = x.reshape(B, S // F, F * D) @ w.T + b
    assert out.shape == (B, S // F, D)
    assert jnp.allclose(out, ref, atol=1e-5, rtol=1e-5), "f32 path mismatch"

    # 2) Multiple M tiles (exercises pipelining) with the default bf16 MXU path.
    B2, S2, D2, F2 = 4, 256, 128, 2
    x2 = jax.random.normal(k3, (B2, S2, D2), dtype=jnp.float32)
    w2, b2 = init_linear_pool_params(k4, D2, F2)
    out2 = jax.block_until_ready(linear_pool(x2, w2, b2, F2, max_tile_m=128))
    ref2 = x2.reshape(B2, S2 // F2, F2 * D2) @ w2.T + b2
    assert out2.shape == (B2, S2 // F2, D2)
    assert jnp.allclose(out2, ref2, atol=5e-2, rtol=5e-2), "bf16 path mismatch"

    # 3) D not a multiple of 128: exercises the lane-padding of N.
    B3, S3, D3, F3 = 2, 8, 96, 4
    x3 = jax.random.normal(k5, (B3, S3, D3), dtype=jnp.float32)
    w3, b3 = init_linear_pool_params(k6, D3, F3)
    out3 = jax.block_until_ready(
        linear_pool(x3, w3, b3, F3, compute_dtype=jnp.float32))
    ref3 = x3.reshape(B3, S3 // F3, F3 * D3) @ w3.T + b3
    assert out3.shape == (B3, S3 // F3, D3)
    assert jnp.allclose(out3, ref3, atol=1e-5, rtol=1e-5), "padded-N path mismatch"

    print("KERNEL_OK")
</pallas_src>

<mosaic_0001>
module attributes {stable_mosaic.version = 11 : i64} {
  func.func @_linear_pool_kernel_single_k(%arg0: i32, %arg1: i32, %arg2: i32, %arg3: memref<8x64xf32, #tpu.memory_space<vmem>>, %arg4: memref<64x128xf32, #tpu.memory_space<vmem>>, %arg5: memref<1x128xf32, #tpu.memory_space<vmem>>, %arg6: memref<8x128xf32, #tpu.memory_space<vmem>>) attributes {dimension_semantics = [#tpu.dimension_semantics<parallel>, #tpu.dimension_semantics<parallel>, #tpu.dimension_semantics<arbitrary>], iteration_bounds = array<i64: 1, 1, 1>, scalar_prefetch = 0 : i64, scratch_operands = 0 : i64, tpu.core_type = #tpu.core_type<tc>, window_params = [{transform_indices = @transform_0, window_bounds = array<i64: 8, 64>}, {pipeline_mode = #tpu.pipeline_mode<synchronous>, transform_indices = @transform_1, window_bounds = array<i64: 64, 128>}, {pipeline_mode = #tpu.pipeline_mode<synchronous>, transform_indices = @transform_2, window_bounds = array<i64: 1, 128>}, {transform_indices = @transform_3, window_bounds = array<i64: 8, 128>}]} {
    %c0 = arith.constant 0 : index
    %c0_0 = arith.constant 0 : index
    %0 = vector.load %arg3[%c0, %c0_0] : memref<8x64xf32, #tpu.memory_space<vmem>>, vector<8x64xf32>
    %c0_1 = arith.constant 0 : index
    %c0_2 = arith.constant 0 : index
    %1 = vector.load %arg4[%c0_1, %c0_2] : memref<64x128xf32, #tpu.memory_space<vmem>>, vector<64x128xf32>
    %cst = arith.constant dense<0.000000e+00> : vector<8x128xf32>
    %2 = tpu.matmul %0, %1, %cst {dimension_numbers = #tpu.dot_dimension_numbers<[1], [0], [0], [1], [0, 0, 1, 1], [], []>} : vector<8x64xf32>, vector<64x128xf32>, vector<8x128xf32> -> vector<8x128xf32>
    %c0_3 = arith.constant 0 : index
    %c0_4 = arith.constant 0 : index
    %3 = vector.load %arg5[%c0_3, %c0_4] : memref<1x128xf32, #tpu.memory_space<vmem>>, vector<1x128xf32>
    %4 = vector.broadcast %3 : vector<1x128xf32> to vector<8x128xf32>
    %5 = arith.addf %2, %4 : vector<8x128xf32>
    %c0_5 = arith.constant 0 : index
    %c0_6 = arith.constant 0 : index
    %6 = vector.load %arg6[%c0_5, %c0_6] : memref<8x128xf32, #tpu.memory_space<vmem>>, vector<8x128xf32>
    tpu.vector_store %arg6[%c0_5, %c0_6], %5 {strides = array<i32>} : memref<8x128xf32, #tpu.memory_space<vmem>>, vector<8x128xf32>,
    return
  }
  func.func @transform_0(%arg0: i32, %arg1: i32, %arg2: i32) -> (i32, i32) {
    %c0_i32 = arith.constant 0 : i32
    return %arg0, %arg2 : i32, i32
  }
  func.func @transform_1(%arg0: i32, %arg1: i32, %arg2: i32) -> (i32, i32) {
    %c0_i32 = arith.constant 0 : i32
    return %arg2, %arg1 : i32, i32
  }
  func.func @transform_2(%arg0: i32, %arg1: i32, %arg2: i32) -> (i32, i32) {
    %c0_i32 = arith.constant 0 : i32
    %c0_i32_0 = arith.constant 0 : i32
    return %c0_i32, %arg1 : i32, i32
  }
  func.func @transform_3(%arg0: i32, %arg1: i32, %arg2: i32) -> (i32, i32) {
    %c0_i32 = arith.constant 0 : i32
    return %arg0, %arg1 : i32, i32
  }
}

module attributes {stable_mosaic.version = 11 : i64} {
  func.func @_linear_pool_kernel_single_k(%arg0: i32, %arg1: i32, %arg2: i32, %arg3: memref<8x64xf32, #tpu.memory_space<vmem>>, %arg4: memref<64x128xf32, #tpu.memory_space<vmem>>, %arg5: memref<1x128xf32, #tpu.memory_space<vmem>>, %arg6: memref<8x128xf32, #tpu.memory_space<vmem>>) attributes {dimension_semantics = [#tpu.dimension_semantics<parallel>, #tpu.dimension_semantics<parallel>, #tpu.dimension_semantics<arbitrary>], iteration_bounds = array<i64: 1, 1, 1>, scalar_prefetch = 0 : i64, scratch_operands = 0 : i64, tpu.core_type = #tpu.core_type<tc>, window_params = [{transform_indices = @transform_0, window_bounds = array<i64: 8, 64>}, {transform_indices = @transform_1, window_bounds = array<i64: 64, 128>}, {transform_indices = @transform_2, window_bounds = array<i64: 1, 128>}, {transform_indices = @transform_3, window_bounds = array<i64: 8, 128>}]} {
    %c0 = arith.constant 0 : index
    %c0_0 = arith.constant 0 : index
    %0 = vector.load %arg3[%c0, %c0_0] : memref<8x64xf32, #tpu.memory_space<vmem>>, vector<8x64xf32>
    %c0_1 = arith.constant 0 : index
    %c0_2 = arith.constant 0 : index
    %1 = vector.load %arg4[%c0_1, %c0_2] : memref<64x128xf32, #tpu.memory_space<vmem>>, vector<64x128xf32>
    %cst = arith.constant dense<0.000000e+00> : vector<8x128xf32>
    %2 = tpu.matmul %0, %1, %cst {dimension_numbers = #tpu.dot_dimension_numbers<[1], [0], [0], [1], [0, 0, 1, 1], [], []>} : vector<8x64xf32>, vector<64x128xf32>, vector<8x128xf32> -> vector<8x128xf32>
    %c0_3 = arith.constant 0 : index
    %c0_4 = arith.constant 0 : index
    %3 = vector.load %arg5[%c0_3, %c0_4] : memref<1x128xf32, #tpu.memory_space<vmem>>, vector<1x128xf32>
    %4 = vector.broadcast %3 : vector<1x128xf32> to vector<8x128xf32>
    %5 = arith.addf %2, %4 : vector<8x128xf32>
    %c0_5 = arith.constant 0 : index
    %c0_6 = arith.constant 0 : index
    %6 = vector.load %arg6[%c0_5, %c0_6] : memref<8x128xf32, #tpu.memory_space<vmem>>, vector<8x128xf32>
    tpu.vector_store %arg6[%c0_5, %c0_6], %5 {strides = array<i32>} : memref<8x128xf32, #tpu.memory_space<vmem>>, vector<8x128xf32>,
    return
  }
  func.func @transform_0(%arg0: i32, %arg1: i32, %arg2: i32) -> (i32, i32) {
    %c0_i32 = arith.constant 0 : i32
    return %arg0, %arg2 : i32, i32
  }
  func.func @transform_1(%arg0: i32, %arg1: i32, %arg2: i32) -> (i32, i32) {
    %c0_i32 = arith.constant 0 : i32
    return %arg2, %arg1 : i32, i32
  }
  func.func @transform_2(%arg0: i32, %arg1: i32, %arg2: i32) -> (i32, i32) {
    %c0_i32 = arith.constant 0 : i32
    %c0_i32_0 = arith.constant 0 : i32
    return %c0_i32, %arg1 : i32, i32
  }
  func.func @transform_3(%arg0: i32, %arg1: i32, %arg2: i32) -> (i32, i32) {
    %c0_i32 = arith.constant 0 : i32
    return %arg0, %arg1 : i32, i32
  }
}

</mosaic_0001>

<llo_original>
// kernel: tpu_custom_call.1
$region0: #{tpu_custom_call.1}
  #allocation0 [shape = 'u32[]', space=smem, size = 0x4, offset = 0x4, fixed_abs, tag = 'smem constant byte address 0x4 - core index']
  #allocation1 [shape = 'u32[144,128]{1,0:T(1,128)}', space=vmem, size = 0x12000, scoped, tag = 'internal scratch']
  %s0 = inlined_call_operand.hbm [shape: f32[8,64], index: 0, kind: input, shape index: {}]
  %s1 = inlined_call_operand.hbm [shape: f32[64,128], index: 1, kind: input, shape index: {}]
  %s2 = inlined_call_operand.vmem [shape: f32[1,128], index: 2, kind: input, shape index: {}]
  %s3 = inlined_call_operand.hbm [shape: f32[8,128], index: 3, kind: output, shape index: {}]
  %s4 = sld [smem:[#allocation0]]
  $region30: #{tpu_custom_call.1} parent=0
    _
  %s6 = ssub.s32 1, %s4
  %s7 = scalar_select 0, %s6, %s4
  $region1: #{tpu_custom_call.1} parent=0
    #allocation2 [shape = 'u8[4096]{0}', space=vmem, size = 0x1000, scoped, tag = 'input window, operand 0, single buffered']
    #allocation3 [shape = 's32[1]{0}', space=sflag, size = 0x4, scoped, tag = 'scoped memory for tpu_custom_call.1']
    #allocation4 [shape = 's32[1]{0}', space=sflag, size = 0x4, scoped, tag = 'scoped memory for tpu_custom_call.1']
    #allocation5 [shape = 'u8[32768]{0}', space=vmem, size = 0x8000, scoped, tag = 'input window, operand 1, single buffered']
    #allocation6 [shape = 's32[1]{0}', space=sflag, size = 0x4, scoped, tag = 'scoped memory for tpu_custom_call.1']
    #allocation7 [shape = 'u8[4096]{0}', space=vmem, size = 0x1000, scoped, tag = 'output window, operand 0, single buffered']
    %8 = vsyncpa [#allocation3], 0
    %9 = vsyncpa [#allocation6], 0
    %10 = vsyncpa [#allocation4], 0
    // Predicated region
    $region2: #{tpu_custom_call.1} parent=1 // pred_check
      _
    $region3: #{tpu_custom_call.1} parent=1 // pred_check_branch
      %12 = sbr.rel (0) target = $region5
    $region4: #{tpu_custom_call.1} parent=1 // pred_region
      %s14 = ssub.s32 128, 128
      %15 = vsyncadd [#allocation3], %s14
      %s17 = sshll.u32 [#allocation2], 4
      %s18 = int_to_ptr.vmem [resolvable:$true] %s17
      %20 = dma.hbm_to_vmem [thread:$0]  %s0, 128, %s18, [#allocation3]
    $region5: #{tpu_custom_call.1} parent=1 // pred_fallthru
      _
    // Predicated region
    $region6: #{tpu_custom_call.1} parent=1 // pred_check
      _
    $region7: #{tpu_custom_call.1} parent=1 // pred_check_branch
      %22 = sbr.rel (0) target = $region9
    $region8: #{tpu_custom_call.1} parent=1 // pred_region
      %s24 = ssub.s32 1024, 1024
      %25 = vsyncadd [#allocation6], %s24
      %s26 = sshll.u32 [#allocation5], 4
      %s27 = int_to_ptr.vmem [resolvable:$true] %s26
      %32 = dma.hbm_to_vmem [thread:$0]  %s1, 1024, %s27, [#allocation6], 128, 128, 8
    $region9: #{tpu_custom_call.1} parent=1 // pred_fallthru
      _
    // Predicated region
    $region10: #{tpu_custom_call.1} parent=1 // pred_check
      _
    $region11: #{tpu_custom_call.1} parent=1 // pred_check_branch
      %34 = sbr.rel (0) target = $region13
    $region12: #{tpu_custom_call.1} parent=1 // pred_region
      _
    $region13: #{tpu_custom_call.1} parent=1 // pred_fallthru
      _
    // Predicated region
    $region14: #{tpu_custom_call.1} parent=1 // pred_check
      _
    $region15: #{tpu_custom_call.1} parent=1 // pred_check_branch
      %36 = sbr.rel (0) target = $region17
    $region16: #{tpu_custom_call.1} parent=1 // pred_region
      %37 = dma.done [#allocation3], 128
    $region17: #{tpu_custom_call.1} parent=1 // pred_fallthru
      _
    // Predicated region
    $region18: #{tpu_custom_call.1} parent=1 // pred_check
      _
    $region19: #{tpu_custom_call.1} parent=1 // pred_check_branch
      %39 = sbr.rel (0) target = $region21
    $region20: #{tpu_custom_call.1} parent=1 // pred_region
      %40 = dma.done [#allocation6], 1024
    $region21: #{tpu_custom_call.1} parent=1 // pred_fallthru
      _
    %v41 = vld [vmem:[#allocation2] sm:$0xff]
    %v42 = vld [vmem:[#allocation5] sm:$0xff]
    %v43 = vld [vmem:[#allocation5 + $0x8] sm:$0xff]
    %v44 = vld [vmem:[#allocation5 + $0x10] sm:$0xff]
    %v45 = vld [vmem:[#allocation5 + $0x18] sm:$0xff]
    %v46 = vld [vmem:[#allocation5 + $0x20] sm:$0xff]
    %v47 = vld [vmem:[#allocation5 + $0x28] sm:$0xff]
    %v48 = vld [vmem:[#allocation5 + $0x30] sm:$0xff]
    %v49 = vld [vmem:[#allocation5 + $0x38] sm:$0xff]
    %v50 = vld [vmem:[%s2] sm:$0x1]
    %v52 = vlaneseq
    %v53 = vshrl.u32 %v52, 7
    %v54 = vsub.s32 0, %v53
    %v55 = vrot.slane %v50, %v54
    %vm57 = vcmask 523264
    %v59 = vsel %vm57, %v41, 0
    %61 = vmatprep.subr.mxu0 0.0
    %62 = vmatpush1.msra.mxu0 %v42
    %63 = vmatprep.subr.mxu0 0.0
    %64 = vmatpush1.msra.mxu0 %v43
    %65 = vmatprep.subr.mxu0 0.0
    %66 = vmatpush1.msra.mxu0 %v44
    %67 = vmatprep.subr.mxu0 0.0
    %68 = vmatpush1.msra.mxu0 %v45
    %69 = vmatprep.subr.mxu0 0.0
    %70 = vmatpush1.msra.mxu0 %v46
    %71 = vmatprep.subr.mxu0 0.0
    %72 = vmatpush1.msra.mxu0 %v47
    %73 = vmatprep.subr.mxu0 0.0
    %74 = vmatpush1.msra.mxu0 %v48
    %75 = vmatprep.subr.mxu0 0.0
    %76 = vmatpush1.msra.mxu0 %v49
    %77 = vmatprep.subr.mxu0 0.0
    %78 = vmatpush1.msra.mxu0 0.0
    %79 = vmatprep.subr.mxu0 0.0
    %80 = vmatpush1.msra.mxu0 0.0
    %81 = vmatprep.subr.mxu0 0.0
    %82 = vmatpush1.msra.mxu0 0.0
    %83 = vmatprep.subr.mxu0 0.0
    %84 = vmatpush1.msra.mxu0 0.0
    %85 = vmatprep.subr.mxu0 0.0
    %86 = vmatpush1.msra.mxu0 0.0
    %87 = vmatprep.subr.mxu0 0.0
    %88 = vmatpush1.msra.mxu0 0.0
    %89 = vmatprep.subr.mxu0 0.0
    %90 = vmatpush1.msra.mxu0 0.0
    %91 = vmatprep.subr.mxu0 0.0
    %92 = vmatpush1.msra.mxu0 0.0
    %93 = vmatprep.subr.mxu0 0.0
    %94 = vmatpush1.msra.mxu0 0.0
    %95 = vmatprep.subr.mxu0 0.0
    %96 = vmatpush1.msra.mxu0 0.0
    %97 = vmatprep.subr.mxu0 0.0
    %98 = vmatpush1.msra.mxu0 0.0
    %99 = vmatprep.subr.mxu0 0.0
    %100 = vmatpush1.msra.mxu0 0.0
    %101 = vmatprep.subr.mxu0 0.0
    %102 = vmatpush1.msra.mxu0 0.0
    %103 = vmatprep.subr.mxu0 0.0
    %104 = vmatpush1.msra.mxu0 0.0
    %105 = vmatprep.subr.mxu0 0.0
    %106 = vmatpush1.msra.mxu0 0.0
    %107 = vmatprep.subr.mxu0 0.0
    %108 = vmatpush1.msra.mxu0 0.0
    %109 = vmatprep.subr.mxu0 0.0
    %110 = vmatpush1.msra.mxu0 0.0
    %111 = vmatprep.subr.mxu0 0.0
    %112 = vmatpush1.msra.mxu0 0.0
    %113 = vmatprep.subr.mxu0 0.0
    %114 = vmatpush1.msra.mxu0 0.0
    %115 = vmatprep.subr.mxu0 0.0
    %116 = vmatpush1.msra.mxu0 0.0
    %117 = vmatprep.subr.mxu0 0.0
    %118 = vmatpush1.msra.mxu0 0.0
    %119 = vmatprep.subr.mxu0 0.0
    %120 = vmatpush1.msra.mxu0 0.0
    %121 = vmatprep.subr.mxu0 0.0
    %122 = vmatpush1.msra.mxu0 0.0
    %123 = vmatprep.subr.mxu0 0.0
    %124 = vmatpush1.msra.mxu0 0.0
    %125 = vmatprep.mubr.f32.mxu0 0.0
    %126 = vmatmul.mubr.f32.gmra.mrb[0].mxu0 %v59
    %v127 = vpop.f32.mrb[0].mxu0
    %v128 = vadd.f32 %v55, %v127
    %v129 = vpop.f32.mrb[0].mxu0
    %130 = vdwg.mxu0
    %131 = vst [vmem:[#allocation7] sm:$0xff] %v128
    // Predicated region
    $region22: #{tpu_custom_call.1} parent=1 // pred_check
      _
    $region23: #{tpu_custom_call.1} parent=1 // pred_check_branch
      %133 = sbr.rel (0) target = $region25
    $region24: #{tpu_custom_call.1} parent=1 // pred_region
      %s135 = ssub.s32 128, 128
      %136 = vsyncadd [#allocation4], %s135
      %s138 = sshll.u32 [#allocation7], 4
      %s139 = int_to_ptr.vmem [resolvable:$true] %s138
      %141 = dma.vmem_to_hbm [thread:$0]  %s139, 128, %s3, [#allocation4]
    $region25: #{tpu_custom_call.1} parent=1 // pred_fallthru
      _
    // Predicated region
    $region26: #{tpu_custom_call.1} parent=1 // pred_check
      _
    $region27: #{tpu_custom_call.1} parent=1 // pred_check_branch
      %143 = sbr.rel (0) target = $region29
    $region28: #{tpu_custom_call.1} parent=1 // pred_region
      %144 = dma.done [#allocation4], 128
    $region29: #{tpu_custom_call.1} parent=1 // pred_fallthru
      _
    %145 = vsyncpa [#allocation3], 1
    %146 = vsyncpa [#allocation6], 1
    %147 = vsyncpa [#allocation4], 1

// kernel: tpu_custom_call.1
$region0: #{tpu_custom_call.1}
  #allocation0 [shape = 'u32[]', space=smem, size = 0x4, offset = 0x4, fixed_abs, tag = 'smem constant byte address 0x4 - core index']
  #allocation1 [shape = 'u32[144,128]{1,0:T(1,128)}', space=vmem, size = 0x12000, scoped, tag = 'internal scratch']
  %s0 = inlined_call_operand.hbm [shape: f32[8,64], index: 0, kind: input, shape index: {}]
  %s1 = inlined_call_operand.hbm [shape: f32[64,128], index: 1, kind: input, shape index: {}]
  %s2 = inlined_call_operand.vmem [shape: f32[1,128], index: 2, kind: input, shape index: {}]
  %s3 = inlined_call_operand.hbm [shape: f32[8,128], index: 3, kind: output, shape index: {}]
  %s4 = sld [smem:[#allocation0]]
  $region30: #{tpu_custom_call.1} parent=0
    _
  %s6 = ssub.s32 1, %s4
  %s7 = scalar_select 0, %s6, %s4
  $region1: #{tpu_custom_call.1} parent=0
    #allocation2 [shape = 'u8[4096]{0}', space=vmem, size = 0x1000, scoped, tag = 'input window, operand 0, single buffered']
    #allocation3 [shape = 's32[1]{0}', space=sflag, size = 0x4, scoped, tag = 'scoped memory for tpu_custom_call.1']
    #allocation4 [shape = 's32[1]{0}', space=sflag, size = 0x4, scoped, tag = 'scoped memory for tpu_custom_call.1']
    #allocation5 [shape = 'u8[32768]{0}', space=vmem, size = 0x8000, scoped, tag = 'input window, operand 1, single buffered']
    #allocation6 [shape = 's32[1]{0}', space=sflag, size = 0x4, scoped, tag = 'scoped memory for tpu_custom_call.1']
    #allocation7 [shape = 'u8[4096]{0}', space=vmem, size = 0x1000, scoped, tag = 'output window, operand 0, single buffered']
    %8 = vsyncpa [#allocation3], 0
    %9 = vsyncpa [#allocation6], 0
    %10 = vsyncpa [#allocation4], 0
    // Predicated region
    $region2: #{tpu_custom_call.1} parent=1 // pred_check
      _
    $region3: #{tpu_custom_call.1} parent=1 // pred_check_branch
      %12 = sbr.rel (0) target = $region5
    $region4: #{tpu_custom_call.1} parent=1 // pred_region
      %s14 = ssub.s32 128, 128
      %15 = vsyncadd [#allocation3], %s14
      %s17 = sshll.u32 [#allocation2], 4
      %s18 = int_to_ptr.vmem [resolvable:$true] %s17
      %20 = dma.hbm_to_vmem [thread:$0]  %s0, 128, %s18, [#allocation3]
    $region5: #{tpu_custom_call.1} parent=1 // pred_fallthru
      _
    // Predicated region
    $region6: #{tpu_custom_call.1} parent=1 // pred_check
      _
    $region7: #{tpu_custom_call.1} parent=1 // pred_check_branch
      %22 = sbr.rel (0) target = $region9
    $region8: #{tpu_custom_call.1} parent=1 // pred_region
      %s24 = ssub.s32 1024, 1024
      %25 = vsyncadd [#allocation6], %s24
      %s26 = sshll.u32 [#allocation5], 4
      %s27 = int_to_ptr.vmem [resolvable:$true] %s26
      %32 = dma.hbm_to_vmem [thread:$0]  %s1, 1024, %s27, [#allocation6], 128, 128, 8
    $region9: #{tpu_custom_call.1} parent=1 // pred_fallthru
      _
    // Predicated region
    $region10: #{tpu_custom_call.1} parent=1 // pred_check
      _
    $region11: #{tpu_custom_call.1} parent=1 // pred_check_branch
      %34 = sbr.rel (0) target = $region13
    $region12: #{tpu_custom_call.1} parent=1 // pred_region
      _
    $region13: #{tpu_custom_call.1} parent=1 // pred_fallthru
      _
    // Predicated region
    $region14: #{tpu_custom_call.1} parent=1 // pred_check
      _
    $region15: #{tpu_custom_call.1} parent=1 // pred_check_branch
      %36 = sbr.rel (0) target = $region17
    $region16: #{tpu_custom_call.1} parent=1 // pred_region
      %37 = dma.done [#allocation3], 128
    $region17: #{tpu_custom_call.1} parent=1 // pred_fallthru
      _
    // Predicated region
    $region18: #{tpu_custom_call.1} parent=1 // pred_check
      _
    $region19: #{tpu_custom_call.1} parent=1 // pred_check_branch
      %39 = sbr.rel (0) target = $region21
    $region20: #{tpu_custom_call.1} parent=1 // pred_region
      %40 = dma.done [#allocation6], 1024
    $region21: #{tpu_custom_call.1} parent=1 // pred_fallthru
      _
    %v41 = vld [vmem:[#allocation2] sm:$0xff]
    %v42 = vld [vmem:[#allocation5] sm:$0xff]
    %v43 = vld [vmem:[#allocation5 + $0x8] sm:$0xff]
    %v44 = vld [vmem:[#allocation5 + $0x10] sm:$0xff]
    %v45 = vld [vmem:[#allocation5 + $0x18] sm:$0xff]
    %v46 = vld [vmem:[#allocation5 + $0x20] sm:$0xff]
    %v47 = vld [vmem:[#allocation5 + $0x28] sm:$0xff]
    %v48 = vld [vmem:[#allocation5 + $0x30] sm:$0xff]
    %v49 = vld [vmem:[#allocation5 + $0x38] sm:$0xff]
    %v50 = vld [vmem:[%s2] sm:$0x1]
    %v52 = vlaneseq
    %v53 = vshrl.u32 %v52, 7
    %v54 = vsub.s32 0, %v53
    %v55 = vrot.slane %v50, %v54
    %vm57 = vcmask 523264
    %v59 = vsel %vm57, %v41, 0
    %61 = vmatprep.subr.mxu0 0.0
    %62 = vmatpush1.msra.mxu0 %v42
    %63 = vmatprep.subr.mxu0 0.0
    %64 = vmatpush1.msra.mxu0 %v43
    %65 = vmatprep.subr.mxu0 0.0
    %66 = vmatpush1.msra.mxu0 %v44
    %67 = vmatprep.subr.mxu0 0.0
    %68 = vmatpush1.msra.mxu0 %v45
    %69 = vmatprep.subr.mxu0 0.0
    %70 = vmatpush1.msra.mxu0 %v46
    %71 = vmatprep.subr.mxu0 0.0
    %72 = vmatpush1.msra.mxu0 %v47
    %73 = vmatprep.subr.mxu0 0.0
    %74 = vmatpush1.msra.mxu0 %v48
    %75 = vmatprep.subr.mxu0 0.0
    %76 = vmatpush1.msra.mxu0 %v49
    %77 = vmatprep.subr.mxu0 0.0
    %78 = vmatpush1.msra.mxu0 0.0
    %79 = vmatprep.subr.mxu0 0.0
    %80 = vmatpush1.msra.mxu0 0.0
    %81 = vmatprep.subr.mxu0 0.0
    %82 = vmatpush1.msra.mxu0 0.0
    %83 = vmatprep.subr.mxu0 0.0
    %84 = vmatpush1.msra.mxu0 0.0
    %85 = vmatprep.subr.mxu0 0.0
    %86 = vmatpush1.msra.mxu0 0.0
    %87 = vmatprep.subr.mxu0 0.0
    %88 = vmatpush1.msra.mxu0 0.0
    %89 = vmatprep.subr.mxu0 0.0
    %90 = vmatpush1.msra.mxu0 0.0
    %91 = vmatprep.subr.mxu0 0.0
    %92 = vmatpush1.msra.mxu0 0.0
    %93 = vmatprep.subr.mxu0 0.0
    %94 = vmatpush1.msra.mxu0 0.0
    %95 = vmatprep.subr.mxu0 0.0
    %96 = vmatpush1.msra.mxu0 0.0
    %97 = vmatprep.subr.mxu0 0.0
    %98 = vmatpush1.msra.mxu0 0.0
    %99 = vmatprep.subr.mxu0 0.0
    %100 = vmatpush1.msra.mxu0 0.0
    %101 = vmatprep.subr.mxu0 0.0
    %102 = vmatpush1.msra.mxu0 0.0
    %103 = vmatprep.subr.mxu0 0.0
    %104 = vmatpush1.msra.mxu0 0.0
    %105 = vmatprep.subr.mxu0 0.0
    %106 = vmatpush1.msra.mxu0 0.0
    %107 = vmatprep.subr.mxu0 0.0
    %108 = vmatpush1.msra.mxu0 0.0
    %109 = vmatprep.subr.mxu0 0.0
    %110 = vmatpush1.msra.mxu0 0.0
    %111 = vmatprep.subr.mxu0 0.0
    %112 = vmatpush1.msra.mxu0 0.0
    %113 = vmatprep.subr.mxu0 0.0
    %114 = vmatpush1.msra.mxu0 0.0
    %115 = vmatprep.subr.mxu0 0.0
    %116 = vmatpush1.msra.mxu0 0.0
    %117 = vmatprep.subr.mxu0 0.0
    %118 = vmatpush1.msra.mxu0 0.0
    %119 = vmatprep.subr.mxu0 0.0
    %120 = vmatpush1.msra.mxu0 0.0
    %121 = vmatprep.subr.mxu0 0.0
    %122 = vmatpush1.msra.mxu0 0.0
    %123 = vmatprep.subr.mxu0 0.0
    %124 = vmatpush1.msra.mxu0 0.0
    %125 = vmatprep.mubr.f32.mxu0 0.0
    %126 = vmatmul.mubr.f32.gmra.mrb[0].mxu0 %v59
    %v127 = vpop.f32.mrb[0].mxu0
    %v128 = vadd.f32 %v55, %v127
    %v129 = vpop.f32.mrb[0].mxu0
    %130 = vdwg.mxu0
    %131 = vst [vmem:[#allocation7] sm:$0xff] %v128
    // Predicated region
    $region22: #{tpu_custom_call.1} parent=1 // pred_check
      _
    $region23: #{tpu_custom_call.1} parent=1 // pred_check_branch
      %133 = sbr.rel (0) target = $region25
    $region24: #{tpu_custom_call.1} parent=1 // pred_region
      %s135 = ssub.s32 128, 128
      %136 = vsyncadd [#allocation4], %s135
      %s138 = sshll.u32 [#allocation7], 4
      %s139 = int_to_ptr.vmem [resolvable:$true] %s138
      %141 = dma.vmem_to_hbm [thread:$0]  %s139, 128, %s3, [#allocation4]
    $region25: #{tpu_custom_call.1} parent=1 // pred_fallthru
      _
    // Predicated region
    $region26: #{tpu_custom_call.1} parent=1 // pred_check
      _
    $region27: #{tpu_custom_call.1} parent=1 // pred_check_branch
      %143 = sbr.rel (0) target = $region29
    $region28: #{tpu_custom_call.1} parent=1 // pred_region
      %144 = dma.done [#allocation4], 128
    $region29: #{tpu_custom_call.1} parent=1 // pred_fallthru
      _
    %145 = vsyncpa [#allocation3], 1
    %146 = vsyncpa [#allocation6], 1
    %147 = vsyncpa [#allocation4], 1

</llo_original>
